<compile_context>
chip_gen: v6e
topology: v6e:2x2x1
jax: 0.10.0
libtpu: 0.0.40
codegen_flags: <defaults>
</compile_context>

<pallas_src>
import functools

import jax
import jax.numpy as jnp
from jax.experimental import pallas as pl
from jax.experimental.pallas import tpu as pltpu

LANE = 128
EMB = 32  # embedding width fixed by the module spec


def _round_up(x, m):
    return ((x + m - 1) // m) * m


def _bdot(a, b):
    """MXU matmul: bf16 operands, f32 accumulation."""
    return jnp.dot(a.astype(jnp.bfloat16), b.astype(jnp.bfloat16),
                   preferred_element_type=jnp.float32)


def _bdot_tb(a, b):
    """a @ b.T with bf16 operands, f32 accumulation."""
    return jax.lax.dot_general(
        a.astype(jnp.bfloat16), b.astype(jnp.bfloat16),
        (((1,), (1,)), ((), ())), preferred_element_type=jnp.float32)


def _prelu(x, a):
    return jnp.where(x > 0, x, a * x)


# ---------------------------------------------------------------------------
# Static layout of the two parameter slabs
# ---------------------------------------------------------------------------
def make_layout(num_nodes, node_feature_size, obs_feature_size, output_size):
    n = num_nodes
    d = EMB * n
    fin = _round_up(node_feature_size + obs_feature_size, 8)
    out_pad = _round_up(output_size, LANE)
    cols = max(2 * EMB, out_pad)
    # bf16 weight slab: row offsets kept multiples of 16 (bf16 sublane tile).
    r_w1 = 0
    r_w2 = _round_up(r_w1 + fin, 16)
    r_gw = _round_up(r_w2 + 2 * EMB, 16)
    r_fw = _round_up(r_gw + EMB, 16)
    r_qk = _round_up(r_fw + EMB, 16)
    w_rows = r_qk + d
    # f32 vector slab.
    r_lng = 8
    r_lnb = r_lng + _round_up(n, 8)
    v_rows = r_lnb + _round_up(n, 8)
    return dict(n=n, d=d, fin=fin, out_size=output_size, out_pad=out_pad,
                cols=cols, r_w1=r_w1, r_w2=r_w2, r_gw=r_gw, r_fw=r_fw,
                r_qk=r_qk, w_rows=w_rows, r_lng=r_lng, r_lnb=r_lnb,
                v_rows=v_rows)


def _unpack(w, v, L):
    """Static slices of the two slabs (works on Refs and on plain arrays)."""
    n, d, fin = L["n"], L["d"], L["fin"]
    w1 = w[L["r_w1"]:L["r_w1"] + fin, 0:2 * EMB]          # [fin, 64] block-diag (nw1 | ow1)
    w2 = w[L["r_w2"]:L["r_w2"] + 2 * EMB, 0:2 * EMB]      # [64, 64]  block-diag (nw2 | ow2)
    gw = w[L["r_gw"]:L["r_gw"] + EMB, 0:EMB]              # [32, 32]
    fw = w[L["r_fw"]:L["r_fw"] + EMB, 0:L["out_pad"]]     # [32, OUT_PAD]
    wqk = w[L["r_qk"]:L["r_qk"] + d, 0:EMB]               # [D, 32]  = Wq @ Wk.T
    wvr = w[L["r_qk"]:L["r_qk"] + d, EMB:2 * EMB]         # [D, 32]  node-block view of Wv
    b1 = v[0:1, 0:2 * EMB]
    b2 = v[1:2, 0:2 * EMB]
    a12 = v[2:3, 0:2 * EMB]                               # per-column PReLU alphas (na | oa)
    gb = v[3:4, 0:EMB]
    ga = v[3:4, EMB:2 * EMB]                              # GCN PReLU alpha (broadcast)
    fb = v[4:5, 0:L["out_pad"]]
    lng = v[L["r_lng"]:L["r_lng"] + n, 0:EMB]             # LayerNorm gamma, [N, 32] layout
    lnb = v[L["r_lnb"]:L["r_lnb"] + n, 0:EMB]             # LayerNorm beta
    return (w1, w2, gw, fw, wqk, wvr, b1, b2, a12, gb, ga, fb, lng, lnb)


# ---------------------------------------------------------------------------
# Fused forward math (used by both the Pallas kernel and the jnp reference)
# ---------------------------------------------------------------------------
def _forward_math(xin, adj, parts, L):
    (w1, w2, gw, fw, wqk, wvr, b1, b2, a12, gb, ga, fb, lng, lnb) = parts
    n, d = L["n"], L["d"]
    m = xin.shape[0] - n

    # --- fused node + obstacle embedding MLPs (block-diagonal weights) -------
    h = _bdot(xin, w1) + b1                                  # [N+M, 64]
    h = _prelu(h, a12)
    e = _bdot(h, w2) + b2                                    # [N+M, 64]
    node_emb = e[0:n, 0:EMB]                                 # [N, 32] f32
    obs_emb = e[n:n + m, EMB:2 * EMB]                        # [M, 32] f32

    # --- cross attention (Wq@Wk.T folded; value path reassociated) -----------
    # Flatten / unflatten between [N,32] node-block layout and the flat [1,D]
    # vector is done with a lane-replication matmul + block-diagonal mask
    # (no vreg reshape needed).
    col = jax.lax.broadcasted_iota(jnp.int32, (n, d), 1)
    blk = jax.lax.broadcasted_iota(jnp.int32, (n, d), 0) * EMB
    bd_mask = (col >= blk) & (col < blk + EMB)               # [N, D] block-diagonal mask
    rep_col = jax.lax.broadcasted_iota(jnp.int32, (EMB, d), 1)
    rep_row = jax.lax.broadcasted_iota(jnp.int32, (EMB, d), 0)
    rep = jnp.where((rep_col & (EMB - 1)) == rep_row, 1.0, 0.0).astype(jnp.bfloat16)

    node_rep = _bdot(node_emb, rep)                          # [N, D]: each row tiled along lanes
    eblk = jnp.where(bd_mask, node_rep, 0.0)                 # block-diag placement of node_emb
    # tq == node_flat @ (Wq @ Wk.T), computed with one K=D matmul + one row-reduce.
    tq = jnp.sum(_bdot(eblk, wqk), axis=0, keepdims=True)    # [1, 32]
    attn = _bdot_tb(tq, obs_emb)                             # [1, M]  (module has no softmax / scaling)
    tv = _bdot(attn, obs_emb)                                # [1, 32] == attn @ obs_emb
    tv_rep = jnp.broadcast_to(_bdot(tv, rep), (n, d))        # [N, D]
    tblk = jnp.where(bd_mask, tv_rep, 0.0)
    new_blk = _bdot(tblk, wvr)                               # [N, 32] == (attn @ obs_emb @ Wv) in block layout
    y = new_blk + node_emb                                   # residual, f32

    # --- LayerNorm over the full flattened feature vector (eps = 1e-6) -------
    dt = jnp.float32(n * EMB)
    s1 = jnp.sum(jnp.sum(y, axis=1, keepdims=True), axis=0, keepdims=True)
    s2 = jnp.sum(jnp.sum(y * y, axis=1, keepdims=True), axis=0, keepdims=True)
    mean = s1 / dt
    var = s2 / dt - mean * mean
    y = (y - mean) * jax.lax.rsqrt(var + 1e-6)
    y = y * lng + lnb

    # --- GCNConv (dense normalized adjacency) + PReLU + final Linear ---------
    xw = _bdot(y, gw)                                        # [N, 32]
    agg = _prelu(_bdot(adj, xw) + gb, ga)                    # Dropout = identity (eval)
    return _bdot(agg, fw) + fb                               # [N, OUT_PAD] lane-dense


def _motion_generator_kernel(xin_ref, adj_ref, w_ref, v_ref, o_ref, *, layout):
    parts = _unpack(w_ref, v_ref, layout)
    o_ref[...] = _forward_math(xin_ref[...], adj_ref[...], parts, layout)


# ---------------------------------------------------------------------------
# JAX glue: one-time prep + thin forward wrapper
# ---------------------------------------------------------------------------
def gcn_norm_dense(edge_index, num_nodes):
    """Dense D^-1/2 (A + I) D^-1/2 (PyG gcn_norm with self loops)."""
    src, dst = edge_index[0], edge_index[1]
    adj = jnp.zeros((num_nodes, num_nodes), jnp.float32)
    adj = adj.at[dst, src].add(1.0)
    adj = adj + jnp.eye(num_nodes, dtype=jnp.float32)
    deg = jnp.sum(adj, axis=1)
    dinv = jnp.where(deg > 0, 1.0 / jnp.sqrt(deg), 0.0)
    return dinv[:, None] * adj * dinv[None, :]


def init_params(key, node_feature_size, obs_feature_size, output_size, num_nodes):
    d = EMB * num_nodes
    ks = list(jax.random.split(key, 14))

    def lin_w(k, fin, fout):
        b = 1.0 / jnp.sqrt(jnp.float32(fin))
        return jax.random.uniform(k, (fin, fout), jnp.float32, -b, b)

    def lin_b(k, fin, fout):
        b = 1.0 / jnp.sqrt(jnp.float32(fin))
        return jax.random.uniform(k, (1, fout), jnp.float32, -b, b)

    return {
        # NodeEmbedding: Linear(F_node,32) -> PReLU -> Dropout -> Linear(32,32)
        "nw1": lin_w(ks[0], node_feature_size, EMB), "nb1": lin_b(ks[1], node_feature_size, EMB),
        "na": jnp.float32(0.25),
        "nw2": lin_w(ks[2], EMB, EMB), "nb2": lin_b(ks[3], EMB, EMB),
        # ObstacleEmbedding
        "ow1": lin_w(ks[4], obs_feature_size, EMB), "ob1": lin_b(ks[5], obs_feature_size, EMB),
        "oa": jnp.float32(0.25),
        "ow2": lin_w(ks[6], EMB, EMB), "ob2": lin_b(ks[7], EMB, EMB),
        # CrossAttention (no bias), stored [in, out]
        "wk": lin_w(ks[8], EMB, d),
        "wq": lin_w(ks[9], d, d),
        "wv": lin_w(ks[10], EMB, d),
        "ln_g": jnp.ones((1, d), jnp.float32),
        "ln_b": jnp.zeros((1, d), jnp.float32),
        # GCNConv(32, 32) + PReLU
        "gw": lin_w(ks[11], EMB, EMB),
        "gb": jnp.zeros((1, EMB), jnp.float32),
        "ga": jnp.float32(0.25),
        # Final Linear(32, output_size)
        "fw": lin_w(ks[12], EMB, output_size), "fb": lin_b(ks[13], EMB, output_size),
    }


def pack_params(p, L):
    """One-time repack: algebraic folds + two lane-dense slabs (bf16 weights, f32 vectors)."""
    n, d = L["n"], L["d"]
    nf, of = p["nw1"].shape[0], p["ow1"].shape[0]
    out_size = p["fw"].shape[1]

    # Exact algebraic fold (f32 precompute, ONE bf16 cast when the slab is cast).
    wqk = p["wq"] @ p["wk"].T                                            # [D, 32]
    # Node-block view of Wv:  wvr[32m + j, k] = Wv[j, 32m + k]
    wvr = p["wv"].reshape(EMB, n, EMB).transpose(1, 0, 2).reshape(d, EMB)

    w = jnp.zeros((L["w_rows"], L["cols"]), jnp.float32)
    w = w.at[L["r_w1"]:L["r_w1"] + nf, 0:EMB].set(p["nw1"])
    w = w.at[L["r_w1"] + nf:L["r_w1"] + nf + of, EMB:2 * EMB].set(p["ow1"])
    w = w.at[L["r_w2"]:L["r_w2"] + EMB, 0:EMB].set(p["nw2"])
    w = w.at[L["r_w2"] + EMB:L["r_w2"] + 2 * EMB, EMB:2 * EMB].set(p["ow2"])
    w = w.at[L["r_gw"]:L["r_gw"] + EMB, 0:EMB].set(p["gw"])
    w = w.at[L["r_fw"]:L["r_fw"] + EMB, 0:out_size].set(p["fw"])
    w = w.at[L["r_qk"]:L["r_qk"] + d, 0:EMB].set(wqk)
    w = w.at[L["r_qk"]:L["r_qk"] + d, EMB:2 * EMB].set(wvr)

    v = jnp.zeros((L["v_rows"], L["cols"]), jnp.float32)
    v = v.at[0, 0:EMB].set(p["nb1"][0])
    v = v.at[0, EMB:2 * EMB].set(p["ob1"][0])
    v = v.at[1, 0:EMB].set(p["nb2"][0])
    v = v.at[1, EMB:2 * EMB].set(p["ob2"][0])
    v = v.at[2, 0:EMB].set(jnp.full((EMB,), p["na"], jnp.float32))
    v = v.at[2, EMB:2 * EMB].set(jnp.full((EMB,), p["oa"], jnp.float32))
    v = v.at[3, 0:EMB].set(p["gb"][0])
    v = v.at[3, EMB:2 * EMB].set(jnp.full((EMB,), p["ga"], jnp.float32))
    v = v.at[4, 0:out_size].set(p["fb"][0])
    v = v.at[L["r_lng"]:L["r_lng"] + n, 0:EMB].set(p["ln_g"].reshape(n, EMB))
    v = v.at[L["r_lnb"]:L["r_lnb"] + n, 0:EMB].set(p["ln_b"].reshape(n, EMB))

    return {"w": w.astype(jnp.bfloat16), "v": v}


def pack_inputs(node_x, obstacles, L):
    """Layout plumbing: [N+M, FIN] with node feats in cols 0:nf, obstacle feats in nf:nf+of."""
    n = L["n"]
    m, of = obstacles.shape
    nf = node_x.shape[1]
    xin = jnp.zeros((n + m, L["fin"]), jnp.float32)
    xin = xin.at[:n, :nf].set(node_x.astype(jnp.float32))
    xin = xin.at[n:, nf:nf + of].set(obstacles.astype(jnp.float32))
    return xin


def motion_generator_forward(packed, node_x, obstacles, adj_bf16, *, layout):
    n = layout["n"]
    xin = pack_inputs(node_x, obstacles, layout)
    kernel = functools.partial(_motion_generator_kernel, layout=layout)
    out = pl.pallas_call(
        kernel,
        out_shape=jax.ShapeDtypeStruct((n, layout["out_pad"]), jnp.float32),
        in_specs=[pl.BlockSpec(memory_space=pltpu.MemorySpace.VMEM)] * 4,
        out_specs=pl.BlockSpec(memory_space=pltpu.MemorySpace.VMEM),
    )(xin, adj_bf16, packed["w"], packed["v"])
    return out[:, :layout["out_size"]]


# ---------------------------------------------------------------------------
# References
# ---------------------------------------------------------------------------
def reference_packed(packed, node_x, obstacles, adj_bf16, L):
    """Same packed weights / same algebra, run by XLA: validates the Pallas lowering."""
    xin = pack_inputs(node_x, obstacles, L)
    parts = _unpack(packed["w"], packed["v"], L)
    return _forward_math(xin, adj_bf16, parts, L)[:, :L["out_size"]]


def reference_module_f32(p, node_x, obstacles, adj, num_nodes):
    """Original module math (unfolded), full f32: validates folds + bf16 policy."""
    hp = jax.lax.Precision.HIGHEST
    dot = lambda a, b: jnp.dot(a, b, precision=hp)
    prelu = lambda x, a: jnp.where(x > 0, x, a * x)
    ne = dot(prelu(dot(node_x, p["nw1"]) + p["nb1"], p["na"]), p["nw2"]) + p["nb2"]
    oe = dot(prelu(dot(obstacles, p["ow1"]) + p["ob1"], p["oa"]), p["ow2"]) + p["ob2"]
    nflat = ne.reshape(1, -1)
    q = dot(nflat, p["wq"])
    k = dot(oe, p["wk"])
    v = dot(oe, p["wv"])
    attn = dot(q, k.T)
    y = dot(attn, v) + nflat
    mean = jnp.mean(y, axis=-1, keepdims=True)
    var = jnp.mean((y - mean) ** 2, axis=-1, keepdims=True)
    y = (y - mean) * jax.lax.rsqrt(var + 1e-6) * p["ln_g"] + p["ln_b"]
    gx = y.reshape(num_nodes, EMB)
    agg = prelu(dot(adj, dot(gx, p["gw"])) + p["gb"], p["ga"])
    return dot(agg, p["fw"]) + p["fb"]


if __name__ == "__main__":
    num_nodes = 8            # graph nodes
    node_feature_size = 4    # per-node input features
    obs_feature_size = 4     # per-obstacle input features
    output_size = 8          # joint angles per node
    num_obs = 5              # number of obstacles

    key = jax.random.PRNGKey(0)
    k_param, k_node, k_obs = jax.random.split(key, 3)

    layout = make_layout(num_nodes, node_feature_size, obs_feature_size, output_size)
    params = init_params(k_param, node_feature_size, obs_feature_size,
                         output_size, num_nodes)
    packed = pack_params(params, layout)            # one-time repack, hoisted off the forward path

    node_x = jax.random.normal(k_node, (num_nodes, node_feature_size), jnp.float32)
    obstacles = jax.random.normal(k_obs, (num_obs, obs_feature_size), jnp.float32)

    # Bidirectional ring graph (no self loops; GCNConv adds them).
    src = jnp.arange(num_nodes, dtype=jnp.int32)
    dst = (src + 1) % num_nodes
    edge_index = jnp.concatenate(
        [jnp.stack([src, dst]), jnp.stack([dst, src])], axis=1)          # [2, 2N]

    adj = gcn_norm_dense(edge_index, num_nodes)      # static-graph precompute, done once
    adj_bf16 = adj.astype(jnp.bfloat16)

    fwd = jax.jit(functools.partial(motion_generator_forward, layout=layout))
    out = jax.block_until_ready(fwd(packed, node_x, obstacles, adj_bf16))
    assert out.shape == (num_nodes, output_size)

    # 1) Tight check: identical packed weights & algebra run by XLA (validates lowering).
    ref_p = reference_packed(packed, node_x, obstacles, adj_bf16, layout)
    err_p = jnp.max(jnp.abs(out - ref_p))
    assert jnp.allclose(out, ref_p, atol=2e-3, rtol=2e-3), f"packed-ref mismatch: {err_p}"

    # 2) Loose check: original module math in full f32 (validates the Wqk fold,
    #    value-path reassociation and bf16-operand policy end to end).
    #    NOTE: the module has no softmax / 1/sqrt(d) scaling; this matches the spec.
    ref_m = reference_module_f32(params, node_x, obstacles, adj, num_nodes)
    err_m = jnp.max(jnp.abs(out - ref_m))
    assert jnp.allclose(out, ref_m, atol=5e-2, rtol=5e-2), f"f32-module-ref mismatch: {err_m}"

    print("KERNEL_OK")
</pallas_src>

<mosaic_0001>
module attributes {stable_mosaic.version = 11 : i64} {
  func.func @_motion_generator_kernel(%arg0: memref<13x8xf32, #tpu.memory_space<vmem>>, %arg1: memref<8x8xbf16, #tpu.memory_space<vmem>>, %arg2: memref<400x128xbf16, #tpu.memory_space<vmem>>, %arg3: memref<24x128xf32, #tpu.memory_space<vmem>>, %arg4: memref<8x128xf32, #tpu.memory_space<vmem>>) attributes {dimension_semantics = [], scalar_prefetch = 0 : i64, scratch_operands = 0 : i64, tpu.core_type = #tpu.core_type<tc>} {
    %c0 = arith.constant 0 : index
    %c0_0 = arith.constant 0 : index
    %0 = vector.load %arg2[%c0, %c0_0] : memref<400x128xbf16, #tpu.memory_space<vmem>>, vector<8x64xbf16>
    %c16 = arith.constant 16 : index
    %c0_1 = arith.constant 0 : index
    %1 = vector.load %arg2[%c16, %c0_1] : memref<400x128xbf16, #tpu.memory_space<vmem>>, vector<64x64xbf16>
    %c80 = arith.constant 80 : index
    %c0_2 = arith.constant 0 : index
    %2 = vector.load %arg2[%c80, %c0_2] : memref<400x128xbf16, #tpu.memory_space<vmem>>, vector<32x32xbf16>
    %c112 = arith.constant 112 : index
    %c0_3 = arith.constant 0 : index
    %3 = vector.load %arg2[%c112, %c0_3] : memref<400x128xbf16, #tpu.memory_space<vmem>>, vector<32x128xbf16>
    %c144 = arith.constant 144 : index
    %c0_4 = arith.constant 0 : index
    %4 = vector.load %arg2[%c144, %c0_4] : memref<400x128xbf16, #tpu.memory_space<vmem>>, vector<256x32xbf16>
    %c144_5 = arith.constant 144 : index
    %c32 = arith.constant 32 : index
    %5 = vector.load %arg2[%c144_5, %c32] : memref<400x128xbf16, #tpu.memory_space<vmem>>, vector<256x32xbf16>
    %c0_6 = arith.constant 0 : index
    %c0_7 = arith.constant 0 : index
    %6 = vector.load %arg3[%c0_6, %c0_7] : memref<24x128xf32, #tpu.memory_space<vmem>>, vector<1x64xf32>
    %c1 = arith.constant 1 : index
    %c0_8 = arith.constant 0 : index
    %7 = vector.load %arg3[%c1, %c0_8] : memref<24x128xf32, #tpu.memory_space<vmem>>, vector<1x64xf32>
    %c2 = arith.constant 2 : index
    %c0_9 = arith.constant 0 : index
    %8 = vector.load %arg3[%c2, %c0_9] : memref<24x128xf32, #tpu.memory_space<vmem>>, vector<1x64xf32>
    %c3 = arith.constant 3 : index
    %c0_10 = arith.constant 0 : index
    %9 = vector.load %arg3[%c3, %c0_10] : memref<24x128xf32, #tpu.memory_space<vmem>>, vector<1x32xf32>
    %c3_11 = arith.constant 3 : index
    %c32_12 = arith.constant 32 : index
    %10 = vector.load %arg3[%c3_11, %c32_12] : memref<24x128xf32, #tpu.memory_space<vmem>>, vector<1x32xf32>
    %c4 = arith.constant 4 : index
    %c0_13 = arith.constant 0 : index
    %11 = vector.load %arg3[%c4, %c0_13] : memref<24x128xf32, #tpu.memory_space<vmem>>, vector<1x128xf32>
    %c8 = arith.constant 8 : index
    %c0_14 = arith.constant 0 : index
    %12 = vector.load %arg3[%c8, %c0_14] : memref<24x128xf32, #tpu.memory_space<vmem>>, vector<8x32xf32>
    %c16_15 = arith.constant 16 : index
    %c0_16 = arith.constant 0 : index
    %13 = vector.load %arg3[%c16_15, %c0_16] : memref<24x128xf32, #tpu.memory_space<vmem>>, vector<8x32xf32>
    %c0_17 = arith.constant 0 : index
    %c0_18 = arith.constant 0 : index
    %14 = vector.load %arg0[%c0_17, %c0_18] : memref<13x8xf32, #tpu.memory_space<vmem>>, vector<13x8xf32>
    %c0_19 = arith.constant 0 : index
    %c0_20 = arith.constant 0 : index
    %15 = vector.load %arg1[%c0_19, %c0_20] : memref<8x8xbf16, #tpu.memory_space<vmem>>, vector<8x8xbf16>
    %16 = arith.truncf %14 : vector<13x8xf32> to vector<13x8xbf16>
    %cst = arith.constant dense<0.000000e+00> : vector<13x64xf32>
    %17 = tpu.matmul %16, %0, %cst {dimension_numbers = #tpu.dot_dimension_numbers<[1], [0], [0], [1], [0, 0, 1, 1], [], []>} : vector<13x8xbf16>, vector<8x64xbf16>, vector<13x64xf32> -> vector<13x64xf32>
    %18 = vector.broadcast %6 : vector<1x64xf32> to vector<13x64xf32>
    %19 = arith.addf %17, %18 : vector<13x64xf32>
    %cst_21 = arith.constant 0.000000e+00 : f32
    %20 = vector.broadcast %cst_21 : f32 to vector<13x64xf32>
    %21 = arith.cmpf ogt, %19, %20 : vector<13x64xf32>
    %22 = vector.broadcast %8 : vector<1x64xf32> to vector<13x64xf32>
    %23 = arith.mulf %22, %19 : vector<13x64xf32>
    %24 = arith.select %21, %19, %23 : vector<13x64xi1>, vector<13x64xf32>
    %25 = arith.truncf %24 : vector<13x64xf32> to vector<13x64xbf16>
    %cst_22 = arith.constant dense<0.000000e+00> : vector<13x64xf32>
    %26 = tpu.matmul %25, %1, %cst_22 {dimension_numbers = #tpu.dot_dimension_numbers<[1], [0], [0], [1], [0, 0, 1, 1], [], []>} : vector<13x64xbf16>, vector<64x64xbf16>, vector<13x64xf32> -> vector<13x64xf32>
    %27 = vector.broadcast %7 : vector<1x64xf32> to vector<13x64xf32>
    %28 = arith.addf %26, %27 : vector<13x64xf32>
    %29 = vector.extract_strided_slice %28 {offsets = [0, 0], sizes = [8, 32], strides = [1, 1]} : vector<13x64xf32> to vector<8x32xf32>
    %30 = vector.extract_strided_slice %28 {offsets = [8, 32], sizes = [5, 32], strides = [1, 1]} : vector<13x64xf32> to vector<5x32xf32>
    %31 = tpu.iota {dimensions = array<i32: 1>} : vector<8x256xi32>
    %32 = tpu.iota {dimensions = array<i32: 0>} : vector<8x256xi32>
    %c32_i32 = arith.constant 32 : i32
    %33 = vector.broadcast %c32_i32 : i32 to vector<8x256xi32>
    %34 = arith.muli %32, %33 : vector<8x256xi32>
    %35 = arith.cmpi sge, %31, %34 : vector<8x256xi32>
    %c32_i32_23 = arith.constant 32 : i32
    %36 = vector.broadcast %c32_i32_23 : i32 to vector<8x256xi32>
    %37 = arith.addi %34, %36 : vector<8x256xi32>
    %38 = arith.cmpi slt, %31, %37 : vector<8x256xi32>
    %39 = arith.andi %35, %38 : vector<8x256xi1>
    %40 = tpu.iota {dimensions = array<i32: 1>} : vector<32x256xi32>
    %41 = tpu.iota {dimensions = array<i32: 0>} : vector<32x256xi32>
    %c31_i32 = arith.constant 31 : i32
    %42 = vector.broadcast %c31_i32 : i32 to vector<32x256xi32>
    %43 = arith.andi %40, %42 : vector<32x256xi32>
    %44 = arith.cmpi eq, %43, %41 : vector<32x256xi32>
    %cst_24 = arith.constant 1.000000e+00 : f32
    %cst_25 = arith.constant 0.000000e+00 : f32
    %45 = vector.broadcast %cst_24 : f32 to vector<32x256xf32>
    %46 = vector.broadcast %cst_25 : f32 to vector<32x256xf32>
    %47 = arith.select %44, %45, %46 : vector<32x256xi1>, vector<32x256xf32>
    %48 = arith.truncf %47 : vector<32x256xf32> to vector<32x256xbf16>
    %49 = arith.truncf %29 : vector<8x32xf32> to vector<8x32xbf16>
    %cst_26 = arith.constant dense<0.000000e+00> : vector<8x256xf32>
    %50 = tpu.matmul %49, %48, %cst_26 {dimension_numbers = #tpu.dot_dimension_numbers<[1], [0], [0], [1], [0, 0, 1, 1], [], []>} : vector<8x32xbf16>, vector<32x256xbf16>, vector<8x256xf32> -> vector<8x256xf32>
    %cst_27 = arith.constant 0.000000e+00 : f32
    %51 = vector.broadcast %cst_27 : f32 to vector<8x256xf32>
    %52 = arith.select %39, %50, %51 : vector<8x256xi1>, vector<8x256xf32>
    %53 = arith.truncf %52 : vector<8x256xf32> to vector<8x256xbf16>
    %cst_28 = arith.constant dense<0.000000e+00> : vector<8x32xf32>
    %54 = tpu.matmul %53, %4, %cst_28 {dimension_numbers = #tpu.dot_dimension_numbers<[1], [0], [0], [1], [0, 0, 1, 1], [], []>} : vector<8x256xbf16>, vector<256x32xbf16>, vector<8x32xf32> -> vector<8x32xf32>
    %cst_29 = arith.constant dense<0.000000e+00> : vector<32xf32>
    %55 = vector.multi_reduction <add>, %54, %cst_29 [0] : vector<8x32xf32> to vector<32xf32>
    %56 = vector.shape_cast %55 : vector<32xf32> to vector<1x32xf32>
    %57 = arith.truncf %56 : vector<1x32xf32> to vector<1x32xbf16>
    %58 = arith.truncf %30 : vector<5x32xf32> to vector<5x32xbf16>
    %cst_30 = arith.constant dense<0.000000e+00> : vector<1x5xf32>
    %59 = tpu.matmul %57, %58, %cst_30 {dimension_numbers = #tpu.dot_dimension_numbers<[1], [1], [0], [0], [0, 0, 1, 0], [], []>} : vector<1x32xbf16>, vector<5x32xbf16>, vector<1x5xf32> -> vector<1x5xf32>
    %60 = arith.truncf %59 : vector<1x5xf32> to vector<1x5xbf16>
    %61 = arith.truncf %30 : vector<5x32xf32> to vector<5x32xbf16>
    %cst_31 = arith.constant dense<0.000000e+00> : vector<1x32xf32>
    %62 = tpu.matmul %60, %61, %cst_31 {dimension_numbers = #tpu.dot_dimension_numbers<[1], [0], [0], [1], [0, 0, 1, 1], [], []>} : vector<1x5xbf16>, vector<5x32xbf16>, vector<1x32xf32> -> vector<1x32xf32>
    %63 = arith.truncf %62 : vector<1x32xf32> to vector<1x32xbf16>
    %cst_32 = arith.constant dense<0.000000e+00> : vector<1x256xf32>
    %64 = tpu.matmul %63, %48, %cst_32 {dimension_numbers = #tpu.dot_dimension_numbers<[1], [0], [0], [1], [0, 0, 1, 1], [], []>} : vector<1x32xbf16>, vector<32x256xbf16>, vector<1x256xf32> -> vector<1x256xf32>
    %65 = vector.shape_cast %64 : vector<1x256xf32> to vector<1x256xf32>
    %66 = vector.broadcast %65 : vector<1x256xf32> to vector<8x256xf32>
    %cst_33 = arith.constant 0.000000e+00 : f32
    %67 = vector.broadcast %cst_33 : f32 to vector<8x256xf32>
    %68 = arith.select %39, %66, %67 : vector<8x256xi1>, vector<8x256xf32>
    %69 = arith.truncf %68 : vector<8x256xf32> to vector<8x256xbf16>
    %cst_34 = arith.constant dense<0.000000e+00> : vector<8x32xf32>
    %70 = tpu.matmul %69, %5, %cst_34 {dimension_numbers = #tpu.dot_dimension_numbers<[1], [0], [0], [1], [0, 0, 1, 1], [], []>} : vector<8x256xbf16>, vector<256x32xbf16>, vector<8x32xf32> -> vector<8x32xf32>
    %71 = arith.addf %70, %29 : vector<8x32xf32>
    %cst_35 = arith.constant dense<0.000000e+00> : vector<8xf32>
    %72 = vector.multi_reduction <add>, %71, %cst_35 [1] : vector<8x32xf32> to vector<8xf32>
    %73 = vector.shape_cast %72 : vector<8xf32> to vector<8x1xf32>
    %cst_36 = arith.constant dense<0.000000e+00> : vector<1xf32>
    %74 = vector.multi_reduction <add>, %73, %cst_36 [0] : vector<8x1xf32> to vector<1xf32>
    %75 = vector.shape_cast %74 : vector<1xf32> to vector<1x1xf32>
    %76 = arith.mulf %71, %71 : vector<8x32xf32>
    %cst_37 = arith.constant dense<0.000000e+00> : vector<8xf32>
    %77 = vector.multi_reduction <add>, %76, %cst_37 [1] : vector<8x32xf32> to vector<8xf32>
    %78 = vector.shape_cast %77 : vector<8xf32> to vector<8x1xf32>
    %cst_38 = arith.constant dense<0.000000e+00> : vector<1xf32>
    %79 = vector.multi_reduction <add>, %78, %cst_38 [0] : vector<8x1xf32> to vector<1xf32>
    %80 = vector.shape_cast %79 : vector<1xf32> to vector<1x1xf32>
    %cst_39 = arith.constant 2.560000e+02 : f32
    %81 = vector.broadcast %cst_39 : f32 to vector<1x1xf32>
    %82 = arith.divf %75, %81 : vector<1x1xf32>
    %cst_40 = arith.constant 2.560000e+02 : f32
    %83 = vector.broadcast %cst_40 : f32 to vector<1x1xf32>
    %84 = arith.divf %80, %83 : vector<1x1xf32>
    %85 = arith.mulf %82, %82 : vector<1x1xf32>
    %86 = arith.subf %84, %85 : vector<1x1xf32>
    %87 = vector.broadcast %82 : vector<1x1xf32> to vector<8x32xf32>
    %88 = arith.subf %71, %87 : vector<8x32xf32>
    %cst_41 = arith.constant 9.99999997E-7 : f32
    %89 = vector.broadcast %cst_41 : f32 to vector<1x1xf32>
    %90 = arith.addf %86, %89 : vector<1x1xf32>
    %91 = math.rsqrt %90 : vector<1x1xf32>
    %92 = vector.broadcast %91 : vector<1x1xf32> to vector<8x32xf32>
    %93 = arith.mulf %88, %92 : vector<8x32xf32>
    %94 = arith.mulf %93, %12 : vector<8x32xf32>
    %95 = arith.addf %94, %13 : vector<8x32xf32>
    %96 = arith.truncf %95 : vector<8x32xf32> to vector<8x32xbf16>
    %cst_42 = arith.constant dense<0.000000e+00> : vector<8x32xf32>
    %97 = tpu.matmul %96, %2, %cst_42 {dimension_numbers = #tpu.dot_dimension_numbers<[1], [0], [0], [1], [0, 0, 1, 1], [], []>} : vector<8x32xbf16>, vector<32x32xbf16>, vector<8x32xf32> -> vector<8x32xf32>
    %98 = arith.truncf %97 : vector<8x32xf32> to vector<8x32xbf16>
    %cst_43 = arith.constant dense<0.000000e+00> : vector<8x32xf32>
    %99 = tpu.matmul %15, %98, %cst_43 {dimension_numbers = #tpu.dot_dimension_numbers<[1], [0], [0], [1], [0, 0, 1, 1], [], []>} : vector<8x8xbf16>, vector<8x32xbf16>, vector<8x32xf32> -> vector<8x32xf32>
    %100 = vector.broadcast %9 : vector<1x32xf32> to vector<8x32xf32>
    %101 = arith.addf %99, %100 : vector<8x32xf32>
    %cst_44 = arith.constant 0.000000e+00 : f32
    %102 = vector.broadcast %cst_44 : f32 to vector<8x32xf32>
    %103 = arith.cmpf ogt, %101, %102 : vector<8x32xf32>
    %104 = vector.broadcast %10 : vector<1x32xf32> to vector<8x32xf32>
    %105 = arith.mulf %104, %101 : vector<8x32xf32>
    %106 = arith.select %103, %101, %105 : vector<8x32xi1>, vector<8x32xf32>
    %107 = arith.truncf %106 : vector<8x32xf32> to vector<8x32xbf16>
    %cst_45 = arith.constant dense<0.000000e+00> : vector<8x128xf32>
    %108 = tpu.matmul %107, %3, %cst_45 {dimension_numbers = #tpu.dot_dimension_numbers<[1], [0], [0], [1], [0, 0, 1, 1], [], []>} : vector<8x32xbf16>, vector<32x128xbf16>, vector<8x128xf32> -> vector<8x128xf32>
    %109 = vector.broadcast %11 : vector<1x128xf32> to vector<8x128xf32>
    %110 = arith.addf %108, %109 : vector<8x128xf32>
    %c0_46 = arith.constant 0 : index
    %c0_47 = arith.constant 0 : index
    %111 = vector.load %arg4[%c0_46, %c0_47] : memref<8x128xf32, #tpu.memory_space<vmem>>, vector<8x128xf32>
    tpu.vector_store %arg4[%c0_46, %c0_47], %110 {strides = array<i32>} : memref<8x128xf32, #tpu.memory_space<vmem>>, vector<8x128xf32>,
    return
  }
}

</mosaic_0001>

<llo_original>
// kernel: motion_generator_forward.1
$region0: #{motion_generator_forward.1}
  #allocation0 [shape = 'u32[]', space=smem, size = 0x4, offset = 0x4, fixed_abs, tag = 'smem constant byte address 0x4 - core index']
  #allocation1 [shape = 'u32[144,128]{1,0:T(1,128)}', space=vmem, size = 0x12000, scoped, tag = 'internal scratch']
  %s0 = inlined_call_operand.vmem [shape: f32[13,8], index: 0, kind: input, shape index: {}]
  %s1 = inlined_call_operand.vmem [shape: bf16[8,8], index: 1, kind: input, shape index: {}]
  %s2 = inlined_call_operand.hbm [shape: bf16[400,128], index: 2, kind: input, shape index: {}]
  %s3 = inlined_call_operand.vmem [shape: f32[24,128], index: 3, kind: input, shape index: {}]
  %s4 = inlined_call_operand.hbm [shape: f32[8,128], index: 4, kind: output, shape index: {}]
  %s5 = sld [smem:[#allocation0]]
  $region30: #{motion_generator_forward.1} parent=0
    _
  %s7 = ssub.s32 1, %s5
  %s8 = scalar_select 0, %s7, %s5
  $region1: #{motion_generator_forward.1} parent=0
    #allocation2 [shape = 'u8[102400]{0}', space=vmem, size = 0x19000, scoped, tag = 'input window, operand 2, single buffered']
    #allocation3 [shape = 's32[1]{0}', space=sflag, size = 0x4, scoped, tag = 'scoped memory for motion_generator_forward.1']
    #allocation4 [shape = 's32[1]{0}', space=sflag, size = 0x4, scoped, tag = 'scoped memory for motion_generator_forward.1']
    #allocation5 [shape = 'u8[4096]{0}', space=vmem, size = 0x1000, scoped, tag = 'output window, operand 0, single buffered']
    %9 = vsyncpa [#allocation3], 0
    %10 = vsyncpa [#allocation4], 0
    // Predicated region
    $region2: #{motion_generator_forward.1} parent=1 // pred_check
      _
    $region3: #{motion_generator_forward.1} parent=1 // pred_check_branch
      %12 = sbr.rel (0) target = $region5
    $region4: #{motion_generator_forward.1} parent=1 // pred_region
      _
    $region5: #{motion_generator_forward.1} parent=1 // pred_fallthru
      _
    // Predicated region
    $region6: #{motion_generator_forward.1} parent=1 // pred_check
      _
    $region7: #{motion_generator_forward.1} parent=1 // pred_check_branch
      %14 = sbr.rel (0) target = $region9
    $region8: #{motion_generator_forward.1} parent=1 // pred_region
      _
    $region9: #{motion_generator_forward.1} parent=1 // pred_fallthru
      _
    // Predicated region
    $region10: #{motion_generator_forward.1} parent=1 // pred_check
      _
    $region11: #{motion_generator_forward.1} parent=1 // pred_check_branch
      %16 = sbr.rel (0) target = $region13
    $region12: #{motion_generator_forward.1} parent=1 // pred_region
      %s18 = ssub.s32 3200, 3200
      %19 = vsyncadd [#allocation3], %s18
      %s20 = sshll.u32 [#allocation2], 4
      %s21 = int_to_ptr.vmem [resolvable:$true] %s20
      %26 = dma.hbm_to_vmem [thread:$0]  %s2, 3200, %s21, [#allocation3], 64, 64, 4
    $region13: #{motion_generator_forward.1} parent=1 // pred_fallthru
      _
    // Predicated region
    $region14: #{motion_generator_forward.1} parent=1 // pred_check
      _
    $region15: #{motion_generator_forward.1} parent=1 // pred_check_branch
      %28 = sbr.rel (0) target = $region17
    $region16: #{motion_generator_forward.1} parent=1 // pred_region
      _
    $region17: #{motion_generator_forward.1} parent=1 // pred_fallthru
      _
    // Predicated region
    $region18: #{motion_generator_forward.1} parent=1 // pred_check
      _
    $region19: #{motion_generator_forward.1} parent=1 // pred_check_branch
      %30 = sbr.rel (0) target = $region21
    $region20: #{motion_generator_forward.1} parent=1 // pred_region
      %31 = dma.done [#allocation3], 3200
    $region21: #{motion_generator_forward.1} parent=1 // pred_fallthru
      _
    %v33 = vld [vmem:[#allocation2] sm:$0xf]
    %v34 = vld [vmem:[#allocation2 + $0x8] sm:$0xf]
    %v35 = vld [vmem:[#allocation2 + $0xc] sm:$0xf]
    %v36 = vld [vmem:[#allocation2 + $0x10] sm:$0xf]
    %v37 = vld [vmem:[#allocation2 + $0x14] sm:$0xf]
    %v38 = vld [vmem:[#allocation2 + $0x18] sm:$0xf]
    %v39 = vld [vmem:[#allocation2 + $0x1c] sm:$0xf]
    %v40 = vld [vmem:[#allocation2 + $0x20] sm:$0xf]
    %v41 = vld [vmem:[#allocation2 + $0x24] sm:$0xf]
    %v42 = vld [vmem:[#allocation2 + $0x28] sm:$0xf]
    %v43 = vld [vmem:[#allocation2 + $0x2c] sm:$0xf]
    %v44 = vld [vmem:[#allocation2 + $0x30] sm:$0xf]
    %v45 = vld [vmem:[#allocation2 + $0x34] sm:$0xf]
    %v46 = vld [vmem:[#allocation2 + $0x38] sm:$0xf]
    %v47 = vld [vmem:[#allocation2 + $0x3c] sm:$0xf]
    %v48 = vld [vmem:[#allocation2 + $0x40] sm:$0xf]
    %v49 = vld [vmem:[#allocation2 + $0x44] sm:$0xf]
    %v50 = vld [vmem:[#allocation2 + $0x48] sm:$0xf]
    %v51 = vld [vmem:[#allocation2 + $0x4c] sm:$0xf]
    %v52 = vld [vmem:[#allocation2 + $0x50] sm:$0xf]
    %v53 = vld [vmem:[#allocation2 + $0x54] sm:$0xf]
    %v54 = vld [vmem:[#allocation2 + $0x58] sm:$0xf]
    %v55 = vld [vmem:[#allocation2 + $0x5c] sm:$0xf]
    %v56 = vld [vmem:[#allocation2 + $0x60] sm:$0xf]
    %v57 = vld [vmem:[#allocation2 + $0x64] sm:$0xf]
    %v58 = vld [vmem:[#allocation2 + $0x68] sm:$0xf]
    %v59 = vld [vmem:[#allocation2 + $0x6c] sm:$0xf]
    %v60 = vld [vmem:[#allocation2 + $0x70] sm:$0xf]
    %v61 = vld [vmem:[#allocation2 + $0x74] sm:$0xf]
    %v62 = vld [vmem:[#allocation2 + $0x78] sm:$0xf]
    %v63 = vld [vmem:[#allocation2 + $0x7c] sm:$0xf]
    %v64 = vld [vmem:[#allocation2 + $0x80] sm:$0xf]
    %v65 = vld [vmem:[#allocation2 + $0x84] sm:$0xf]
    %v66 = vld [vmem:[#allocation2 + $0x88] sm:$0xf]
    %v67 = vld [vmem:[#allocation2 + $0x8c] sm:$0xf]
    %v68 = vld [vmem:[#allocation2 + $0x90] sm:$0xf]
    %v69 = vld [vmem:[#allocation2 + $0x94] sm:$0xf]
    %v70 = vld [vmem:[#allocation2 + $0x98] sm:$0xf]
    %v71 = vld [vmem:[#allocation2 + $0x9c] sm:$0xf]
    %v72 = vld [vmem:[#allocation2 + $0xa0] sm:$0xf]
    %v73 = vld [vmem:[#allocation2 + $0xa4] sm:$0xf]
    %v74 = vld [vmem:[#allocation2 + $0xa8] sm:$0xf]
    %v75 = vld [vmem:[#allocation2 + $0xac] sm:$0xf]
    %v76 = vld [vmem:[#allocation2 + $0xb0] sm:$0xf]
    %v77 = vld [vmem:[#allocation2 + $0xb4] sm:$0xf]
    %v78 = vld [vmem:[#allocation2 + $0xb8] sm:$0xf]
    %v79 = vld [vmem:[#allocation2 + $0xbc] sm:$0xf]
    %v80 = vld [vmem:[#allocation2 + $0xc0] sm:$0xf]
    %v81 = vld [vmem:[#allocation2 + $0xc4] sm:$0xf]
    %v82 = vld [vmem:[%s3] sm:$0x1]
    %v83 = vld [vmem:[%s3 + $0x1] sm:$0x1]
    %v84 = vld [vmem:[%s3 + $0x2] sm:$0x1]
    %v85 = vld [vmem:[%s3 + $0x3] sm:$0x1]
    %v86 = vld [vmem:[%s3 + $0x4] sm:$0x1]
    %v87 = vld [vmem:[%s3 + $0x8] sm:$0xff]
    %v88 = vld [vmem:[%s3 + $0x10] sm:$0xff]
    %v89 = vld [vmem:[%s0] sm:$0xff]
    %v90 = vld [vmem:[%s0 + $0x8] sm:$0x1f]
    %v91 = vld [vmem:[%s1] sm:$0xf]
    %v92 = vpack.c.bf16 %v90, %v89
    %v93 = vlaneseq
    %v94 = vshrl.u32 %v93, 7
    %v95 = vsub.s32 0, %v94
    %v96 = vrot.slane %v82, %v95
    %vm97 = vcmask 64512
    %v99 = vsel %vm97, %v92, 0
    %vm101 = vcmask 1043456
    %v103 = vsel %vm101, %v33, 0
    %105 = vmatprep.subr.bf16.mxu0 0
    %106 = vmatpush1.bf16.msra.mxu0 0
    %107 = vmatprep.subr.bf16.mxu0 0
    %108 = vmatpush1.bf16.msra.mxu0 0
    %109 = vmatprep.subr.bf16.mxu0 0
    %110 = vmatpush1.bf16.msra.mxu0 0
    %111 = vmatprep.subr.bf16.mxu0 0
    %112 = vmatpush1.bf16.msra.mxu0 0
    %113 = vmatprep.subr.bf16.mxu0 0
    %114 = vmatpush1.bf16.msra.mxu0 0
    %115 = vmatprep.subr.bf16.mxu0 0
    %116 = vmatpush1.bf16.msra.mxu0 0
    %117 = vmatprep.subr.bf16.mxu0 0
    %118 = vmatpush1.bf16.msra.mxu0 0
    %119 = vmatprep.subr.bf16.mxu0 0
    %120 = vmatpush1.bf16.msra.mxu0 %v103
    %121 = vmatprep.subr.bf16.mxu0 0
    %122 = vmatpush2.bf16.msra.mxu0 0
    %123 = vmatprep.subr.bf16.mxu0 0
    %124 = vmatpush2.bf16.msra.mxu0 0
    %125 = vmatprep.subr.bf16.mxu0 0
    %126 = vmatpush2.bf16.msra.mxu0 0
    %127 = vmatprep.subr.bf16.mxu0 0
    %128 = vmatpush2.bf16.msra.mxu0 0
    %129 = vmatprep.subr.bf16.mxu0 0
    %130 = vmatpush2.bf16.msra.mxu0 0
    %131 = vmatprep.subr.bf16.mxu0 0
    %132 = vmatpush2.bf16.msra.mxu0 0
    %133 = vmatprep.subr.bf16.mxu0 0
    %134 = vmatpush2.bf16.msra.mxu0 0
    %135 = vmatprep.subr.bf16.mxu0 0
    %136 = vmatpush2.bf16.msra.mxu0 0
    %137 = vmatprep.mubr.bf16.mxu0 0
    %138 = vmatmul.mubr.bf16.gmra.mxu0 %v99
    %v139 = vpop.f32.mrf.mxu0
    %v140 = vadd.f32 %v96, %v139
    %v141 = vpop.f32.mrf.mxu0
    %v142 = vpop.f32.mrf.mxu0
    %v143 = vadd.f32 %v96, %v142
    %v144 = vpop.f32.mrf.mxu0
    %145 = vdwg.mxu0
    %vm146 = vcmp.gt.f32.partialorder %v140, 0.0
    %vm147 = vcmp.gt.f32.partialorder %v143, 0.0
    %v148 = vlaneseq
    %v149 = vshrl.u32 %v148, 7
    %v150 = vsub.s32 0, %v149
    %v151 = vrot.slane %v84, %v150
    %v152 = vmul.f32 %v151, %v140
    %v153 = vmul.f32 %v151, %v143
    %v154 = vsel %vm146, %v140, %v152
    %v155 = vsel %vm147, %v143, %v153
    %v156 = vpack.c.bf16 %v155, %v154
    %v157 = vlaneseq
    %v158 = vshrl.u32 %v157, 7
    %v159 = vsub.s32 0, %v158
    %v160 = vrot.slane %v83, %v159
    %v169 = vunpack.c.l.b16 %v34
    %v170 = vunpack.c.l.b16 %v35
    %v171 = vunpack.c.l.b16 %v36
    %v172 = vunpack.c.l.b16 %v37
    %v173 = vunpack.c.l.b16 %v38
    %v174 = vunpack.c.l.b16 %v39
    %v175 = vunpack.c.l.b16 %v40
    %v176 = vunpack.c.l.b16 %v41
    %v177 = vpack.c.b16 %v170, %v169
    %v178 = vpack.c.b16 %v172, %v171
    %v179 = vpack.c.b16 %v174, %v173
    %v180 = vpack.c.b16 %v176, %v175
    %vm185 = vcmask 523264
    %v187 = vsel %vm185, %v156, 0
    %189 = vmatprep.subr.bf16.mxu0 0
    %190 = vmatpush1.bf16.msra.mxu0 0
    %191 = vmatprep.subr.bf16.mxu0 0
    %192 = vmatpush1.bf16.msra.mxu0 0
    %193 = vmatprep.subr.bf16.mxu0 0
    %194 = vmatpush1.bf16.msra.mxu0 0
    %195 = vmatprep.subr.bf16.mxu0 0
    %196 = vmatpush1.bf16.msra.mxu0 0
    %197 = vmatprep.subr.bf16.mxu0 0
    %198 = vmatpush1.bf16.msra.mxu0 %v180
    %199 = vmatprep.subr.bf16.mxu0 0
    %200 = vmatpush1.bf16.msra.mxu0 %v179
    %201 = vmatprep.subr.bf16.mxu0 0
    %202 = vmatpush1.bf16.msra.mxu0 %v178
    %203 = vmatprep.subr.bf16.mxu0 0
    %204 = vmatpush1.bf16.msra.mxu0 %v177
    %205 = vmatprep.subr.bf16.mxu0 0
    %206 = vmatpush2.bf16.msra.mxu0 0
    %207 = vmatprep.subr.bf16.mxu0 0
    %208 = vmatpush2.bf16.msra.mxu0 0
    %209 = vmatprep.subr.bf16.mxu0 0
    %210 = vmatpush2.bf16.msra.mxu0 0
    %211 = vmatprep.subr.bf16.mxu0 0
    %212 = vmatpush2.bf16.msra.mxu0 0
    %213 = vmatprep.subr.bf16.mxu0 0
    %214 = vmatpush2.bf16.msra.mxu0 0
    %215 = vmatprep.subr.bf16.mxu0 0
    %216 = vmatpush2.bf16.msra.mxu0 0
    %217 = vmatprep.subr.bf16.mxu0 0
    %218 = vmatpush2.bf16.msra.mxu0 0
    %219 = vmatprep.subr.bf16.mxu0 0
    %220 = vmatpush2.bf16.msra.mxu0 0
    %221 = vmatprep.mubr.bf16.mxu0 0
    %222 = vmatmul.mubr.bf16.gmra.mxu0 %v187
    %v223 = vpop.f32.mrf.mxu0
    %v224 = vadd.f32 %v160, %v223
    %v225 = vpop.f32.mrf.mxu0
    %v226 = vpop.f32.mrf.mxu0
    %v227 = vadd.f32 %v160, %v226
    %v228 = vpop.f32.mrf.mxu0
    %229 = vdwg.mxu0
    %v230 = vlaneseq
    %v231 = vand.u32 %v230, 127
    %v232 = vadd.s32 %v231, 128
    %v233 = vlaneseq
    %v234 = vshrl.u32 %v233, 7
    %v235 = vmul.u32 %v234, 32
    %vm236 = vcmp.ge.s32.totalorder %v231, %v235
    %vm237 = vcmp.ge.s32.totalorder %v232, %v235
    %v238 = vadd.s32 %v235, 32
    %vm239 = vcmp.lt.s32.totalorder %v231, %v238
    %vm240 = vcmp.lt.s32.totalorder %v232, %v238
    %vm241 = vmand %vm236, %vm239
    %vm242 = vmand %vm237, %vm240
    %v243 = vadd.s32 %v234, 8
    %v244 = vadd.s32 %v234, 16
    %v245 = vadd.s32 %v234, 24
    %v246 = vand.u32 %v231, 31
    %v247 = vand.u32 %v232, 31
    %vm248 = vcmp.eq.s32.totalorder %v246, %v234
    %vm249 = vcmp.eq.s32.totalorder %v247, %v234
    %vm250 = vcmp.eq.s32.totalorder %v246, %v243
    %vm251 = vcmp.eq.s32.totalorder %v247, %v243
    %vm252 = vcmp.eq.s32.totalorder %v246, %v244
    %vm253 = vcmp.eq.s32.totalorder %v247, %v244
    %vm254 = vcmp.eq.s32.totalorder %v246, %v245
    %vm255 = vcmp.eq.s32.totalorder %v247, %v245
    %v256 = vsel %vm248, 1.0, 0.0
    %v257 = vsel %vm249, 1.0, 0.0
    %v258 = vsel %vm250, 1.0, 0.0
    %v259 = vsel %vm251, 1.0, 0.0
    %v260 = vsel %vm252, 1.0, 0.0
    %v261 = vsel %vm253, 1.0, 0.0
    %v262 = vsel %vm254, 1.0, 0.0
    %v263 = vsel %vm255, 1.0, 0.0
    %v264 = vpack.c.bf16 %v258, %v256
    %v265 = vpack.c.bf16 %v259, %v257
    %v266 = vpack.c.bf16 %v262, %v260
    %v267 = vpack.c.bf16 %v263, %v261
    %v268 = vpack.c.bf16 %v224, %v224
    %vm269 = vcmask 261120
    %v271 = vsel %vm269, %v268, 0
    %273 = vmatprep.subr.bf16.mxu0 0
    %274 = vmatpush1.bf16.msra.mxu0 0
    %275 = vmatprep.subr.bf16.mxu0 0
    %276 = vmatpush1.bf16.msra.mxu0 0
    %277 = vmatprep.subr.bf16.mxu0 0
    %278 = vmatpush1.bf16.msra.mxu0 0
    %279 = vmatprep.subr.bf16.mxu0 0
    %280 = vmatpush1.bf16.msra.mxu0 0
    %281 = vmatprep.subr.bf16.mxu0 0
    %282 = vmatpush1.bf16.msra.mxu0 0
    %283 = vmatprep.subr.bf16.mxu0 0
    %284 = vmatpush1.bf16.msra.mxu0 0
    %285 = vmatprep.subr.bf16.mxu0 %v267
    %286 = vmatpush1.bf16.msra.mxu0 %v266
    %287 = vmatprep.subr.bf16.mxu0 %v265
    %288 = vmatpush1.bf16.msra.mxu0 %v264
    %289 = vmatprep.subr.bf16.mxu0 0
    %290 = vmatpush2.bf16.msra.mxu0 0
    %291 = vmatprep.subr.bf16.mxu0 0
    %292 = vmatpush2.bf16.msra.mxu0 0
    %293 = vmatprep.subr.bf16.mxu0 0
    %294 = vmatpush2.bf16.msra.mxu0 0
    %295 = vmatprep.subr.bf16.mxu0 0
    %296 = vmatpush2.bf16.msra.mxu0 0
    %297 = vmatprep.subr.bf16.mxu0 0
    %298 = vmatpush2.bf16.msra.mxu0 0
    %299 = vmatprep.subr.bf16.mxu0 0
    %300 = vmatpush2.bf16.msra.mxu0 0
    %301 = vmatprep.subr.bf16.mxu0 0
    %302 = vmatpush2.bf16.msra.mxu0 0
    %303 = vmatprep.subr.bf16.mxu0 0
    %304 = vmatpush2.bf16.msra.mxu0 0
    %305 = vmatprep.mubr.bf16.mxu0 0
    %306 = vmatmul.mubr.bf16.gmra.mxu0 %v271
    %v307 = vpop.f32.mrf.mxu0
    %v308 = vadd.f32 0.0, %v307
    %v309 = vpop.f32.mrf.mxu0
    %v310 = vadd.f32 0.0, %v309
    %v311 = vpop.f32.mrf.mxu0
    %v312 = vpop.f32.mrf.mxu0
    %313 = vdwg.mxu0
    %v314 = vsel %vm241, %v308, 0.0
    %v315 = vsel %vm242, %v310, 0.0
    %v316 = vpack.c.bf16 %v314, %v314
    %v317 = vpack.c.bf16 %v315, %v315
    %v350 = vunpack.c.l.b16 %v50
    %v351 = vunpack.c.l.b16 %v51
    %v352 = vunpack.c.l.b16 %v52
    %v353 = vunpack.c.l.b16 %v53
    %v354 = vunpack.c.l.b16 %v54
    %v355 = vunpack.c.l.b16 %v55
    %v356 = vunpack.c.l.b16 %v56
    %v357 = vunpack.c.l.b16 %v57
    %v358 = vunpack.c.l.b16 %v58
    %v359 = vunpack.c.l.b16 %v59
    %v360 = vunpack.c.l.b16 %v60
    %v361 = vunpack.c.l.b16 %v61
    %v362 = vunpack.c.l.b16 %v62
    %v363 = vunpack.c.l.b16 %v63
    %v364 = vunpack.c.l.b16 %v64
    %v365 = vunpack.c.l.b16 %v65
    %v366 = vunpack.c.l.b16 %v66
    %v367 = vunpack.c.l.b16 %v67
    %v368 = vunpack.c.l.b16 %v68
    %v369 = vunpack.c.l.b16 %v69
    %v370 = vunpack.c.l.b16 %v70
    %v371 = vunpack.c.l.b16 %v71
    %v372 = vunpack.c.l.b16 %v72
    %v373 = vunpack.c.l.b16 %v73
    %v374 = vunpack.c.l.b16 %v74
    %v375 = vunpack.c.l.b16 %v75
    %v376 = vunpack.c.l.b16 %v76
    %v377 = vunpack.c.l.b16 %v77
    %v378 = vunpack.c.l.b16 %v78
    %v379 = vunpack.c.l.b16 %v79
    %v380 = vunpack.c.l.b16 %v80
    %v381 = vunpack.c.l.b16 %v81
    %v382 = vpack.c.b16 %v351, %v350
    %v383 = vpack.c.b16 %v353, %v352
    %v384 = vpack.c.b16 %v355, %v354
    %v385 = vpack.c.b16 %v357, %v356
    %v386 = vpack.c.b16 %v359, %v358
    %v387 = vpack.c.b16 %v361, %v360
    %v388 = vpack.c.b16 %v363, %v362
    %v389 = vpack.c.b16 %v365, %v364
    %v390 = vpack.c.b16 %v367, %v366
    %v391 = vpack.c.b16 %v369, %v368
    %v392 = vpack.c.b16 %v371, %v370
    %v393 = vpack.c.b16 %v373, %v372
    %v394 = vpack.c.b16 %v375, %v374
    %v395 = vpack.c.b16 %v377, %v376
    %v396 = vpack.c.b16 %v379, %v378
    %v397 = vpack.c.b16 %v381, %v380
    %414 = vmatprep.subr.bf16.mxu0 0
    %415 = vmatpush1.bf16.msra.mxu0 %v389
    %416 = vmatprep.subr.bf16.mxu0 0
    %417 = vmatpush1.bf16.msra.mxu0 %v388
    %418 = vmatprep.subr.bf16.mxu0 0
    %419 = vmatpush1.bf16.msra.mxu0 %v387
    %420 = vmatprep.subr.bf16.mxu0 0
    %421 = vmatpush1.bf16.msra.mxu0 %v386
    %422 = vmatprep.subr.bf16.mxu0 0
    %423 = vmatpush1.bf16.msra.mxu0 %v385
    %424 = vmatprep.subr.bf16.mxu0 0
    %425 = vmatpush1.bf16.msra.mxu0 %v384
    %426 = vmatprep.subr.bf16.mxu0 0
    %427 = vmatpush1.bf16.msra.mxu0 %v383
    %428 = vmatprep.subr.bf16.mxu0 0
    %429 = vmatpush1.bf16.msra.mxu0 %v382
    %430 = vmatprep.subr.bf16.mxu0 0
    %431 = vmatpush2.bf16.msra.mxu0 %v397
    %432 = vmatprep.subr.bf16.mxu0 0
    %433 = vmatpush2.bf16.msra.mxu0 %v396
    %434 = vmatprep.subr.bf16.mxu0 0
    %435 = vmatpush2.bf16.msra.mxu0 %v395
    %436 = vmatprep.subr.bf16.mxu0 0
    %437 = vmatpush2.bf16.msra.mxu0 %v394
    %438 = vmatprep.subr.bf16.mxu0 0
    %439 = vmatpush2.bf16.msra.mxu0 %v393
    %440 = vmatprep.subr.bf16.mxu0 0
    %441 = vmatpush2.bf16.msra.mxu0 %v392
    %442 = vmatprep.subr.bf16.mxu0 0
    %443 = vmatpush2.bf16.msra.mxu0 %v391
    %444 = vmatprep.subr.bf16.mxu0 0
    %445 = vmatpush2.bf16.msra.mxu0 %v390
    %446 = vmatprep.mubr.bf16.mxu0 %v317
    %447 = vmatmul.mubr.bf16.gmra.mxu0 %v316
    %v448 = vpop.f32.mrf.mxu0
    %v449 = vadd.f32 0.0, %v448
    %v450 = vpop.f32.mrf.mxu0
    %v451 = vpop.f32.mrf.mxu0
    %v452 = vpop.f32.mrf.mxu0
    %453 = vdwg.mxu0
    %v454 = vsel %vm269, %v449, 0.0
    %v455 = vrot.slane %v454, 4
    %v456 = vadd.f32 %v454, %v455
    %v457 = vrot.slane %v456, 2
    %v458 = vadd.f32 %v456, %v457
    %v459 = vrot.slane %v458, 1
    %v460 = vadd.f32 %v458, %v459
    %v461 = vpack.c.bf16 %v460, %v460
    %v462 = vpack.c.bf16 %v227, %v227
    %464 = vrot.lane.b32.xlu0 %v462, 96
    %v465 = vpop.permute.xlu0 %464
    %v467 = vsel %vm269, %v461, 0
    %v470 = vsel %vm269, %v465, 0
    %472 = vmatprep.subr.bf16.mxu0 0
    %473 = vmatpush1.bf16.xpose.msra.mxu0 0
    %474 = vmatprep.subr.bf16.mxu0 0
    %475 = vmatpush1.bf16.xpose.msra.mxu0 0
    %476 = vmatprep.subr.bf16.mxu0 0
    %477 = vmatpush1.bf16.xpose.msra.mxu0 0
    %478 = vmatprep.subr.bf16.mxu0 0
    %479 = vmatpush1.bf16.xpose.msra.mxu0 0
    %480 = vmatprep.subr.bf16.mxu0 0
    %481 = vmatpush1.bf16.xpose.msra.mxu0 0
    %482 = vmatprep.subr.bf16.mxu0 0
    %483 = vmatpush1.bf16.xpose.msra.mxu0 0
    %484 = vmatprep.subr.bf16.mxu0 0
    %485 = vmatpush1.bf16.xpose.msra.mxu0 0
    %486 = vmatprep.subr.bf16.mxu0 0
    %487 = vmatpush1.bf16.xpose.msra.mxu0 %v470
    %488 = vmatprep.subr.bf16.mxu0 0
    %489 = vmatpush2.bf16.xpose.msra.mxu0 0
    %490 = vmatprep.subr.bf16.mxu0 0
    %491 = vmatpush2.bf16.xpose.msra.mxu0 0
    %492 = vmatprep.subr.bf16.mxu0 0
    %493 = vmatpush2.bf16.xpose.msra.mxu0 0
    %494 = vmatprep.subr.bf16.mxu0 0
    %495 = vmatpush2.bf16.xpose.msra.mxu0 0
    %496 = vmatprep.subr.bf16.mxu0 0
    %497 = vmatpush2.bf16.xpose.msra.mxu0 0
    %498 = vmatprep.subr.bf16.mxu0 0
    %499 = vmatpush2.bf16.xpose.msra.mxu0 0
    %500 = vmatprep.subr.bf16.mxu0 0
    %501 = vmatpush2.bf16.xpose.msra.mxu0 0
    %502 = vmatprep.subr.bf16.mxu0 0
    %503 = vmatpush2.bf16.xpose.msra.mxu0 0
    %504 = vmatprep.mubr.bf16.mxu0 0
    %505 = vmatmul.mubr.bf16.gmra.mxu0 %v467
    %v506 = vpop.f32.mrf.mxu0
    %v507 = vadd.f32 0.0, %v506
    %v508 = vpop.f32.mrf.mxu0
    %v509 = vpop.f32.mrf.mxu0
    %v510 = vpop.f32.mrf.mxu0
    %511 = vdwg.mxu0
    %v512 = vpack.c.bf16 %v507, %v507
    %vm513 = vcmask 39936
    %v515 = vsel %vm513, %v512, 0
    %vm517 = vcmask 1041408
    %vm518 = vcmask 1042432
    %v519 = vsel %vm517, 4294967295, 65535
    %v520 = vsel %vm518, %v519, 0
    %v521 = vand.u32 %v465, %v520
    %523 = vmatprep.subr.bf16.mxu0 0
    %524 = vmatpush1.bf16.msra.mxu0 0
    %525 = vmatprep.subr.bf16.mxu0 0
    %526 = vmatpush1.bf16.msra.mxu0 0
    %527 = vmatprep.subr.bf16.mxu0 0
    %528 = vmatpush1.bf16.msra.mxu0 0
    %529 = vmatprep.subr.bf16.mxu0 0
    %530 = vmatpush1.bf16.msra.mxu0 0
    %531 = vmatprep.subr.bf16.mxu0 0
    %532 = vmatpush1.bf16.msra.mxu0 0
    %533 = vmatprep.subr.bf16.mxu0 0
    %534 = vmatpush1.bf16.msra.mxu0 0
    %535 = vmatprep.subr.bf16.mxu0 0
    %536 = vmatpush1.bf16.msra.mxu0 0
    %537 = vmatprep.subr.bf16.mxu0 0
    %538 = vmatpush1.bf16.msra.mxu0 %v521
    %539 = vmatprep.subr.bf16.mxu0 0
    %540 = vmatpush2.bf16.msra.mxu0 0
    %541 = vmatprep.subr.bf16.mxu0 0
    %542 = vmatpush2.bf16.msra.mxu0 0
    %543 = vmatprep.subr.bf16.mxu0 0
    %544 = vmatpush2.bf16.msra.mxu0 0
    %545 = vmatprep.subr.bf16.mxu0 0
    %546 = vmatpush2.bf16.msra.mxu0 0
    %547 = vmatprep.subr.bf16.mxu0 0
    %548 = vmatpush2.bf16.msra.mxu0 0
    %549 = vmatprep.subr.bf16.mxu0 0
    %550 = vmatpush2.bf16.msra.mxu0 0
    %551 = vmatprep.subr.bf16.mxu0 0
    %552 = vmatpush2.bf16.msra.mxu0 0
    %553 = vmatprep.subr.bf16.mxu0 0
    %554 = vmatpush2.bf16.msra.mxu0 0
    %555 = vmatprep.mubr.bf16.mxu0 0
    %556 = vmatmul.mubr.bf16.gmra.mxu0 %v515
    %v557 = vpop.f32.mrf.mxu0
    %v558 = vadd.f32 0.0, %v557
    %v559 = vpop.f32.mrf.mxu0
    %v560 = vpop.f32.mrf.mxu0
    %v561 = vpop.f32.mrf.mxu0
    %562 = vdwg.mxu0
    %v563 = vpack.c.bf16 %v558, %v558
    %v565 = vsel %vm269, %v563, 0
    %567 = vmatprep.subr.bf16.mxu0 0
    %568 = vmatpush1.bf16.msra.mxu0 0
    %569 = vmatprep.subr.bf16.mxu0 0
    %570 = vmatpush1.bf16.msra.mxu0 0
    %571 = vmatprep.subr.bf16.mxu0 0
    %572 = vmatpush1.bf16.msra.mxu0 0
    %573 = vmatprep.subr.bf16.mxu0 0
    %574 = vmatpush1.bf16.msra.mxu0 0
    %575 = vmatprep.subr.bf16.mxu0 0
    %576 = vmatpush1.bf16.msra.mxu0 0
    %577 = vmatprep.subr.bf16.mxu0 0
    %578 = vmatpush1.bf16.msra.mxu0 0
    %579 = vmatprep.subr.bf16.mxu0 %v267
    %580 = vmatpush1.bf16.msra.mxu0 %v266
    %581 = vmatprep.subr.bf16.mxu0 %v265
    %582 = vmatpush1.bf16.msra.mxu0 %v264
    %583 = vmatprep.subr.bf16.mxu0 0
    %584 = vmatpush2.bf16.msra.mxu0 0
    %585 = vmatprep.subr.bf16.mxu0 0
    %586 = vmatpush2.bf16.msra.mxu0 0
    %587 = vmatprep.subr.bf16.mxu0 0
    %588 = vmatpush2.bf16.msra.mxu0 0
    %589 = vmatprep.subr.bf16.mxu0 0
    %590 = vmatpush2.bf16.msra.mxu0 0
    %591 = vmatprep.subr.bf16.mxu0 0
    %592 = vmatpush2.bf16.msra.mxu0 0
    %593 = vmatprep.subr.bf16.mxu0 0
    %594 = vmatpush2.bf16.msra.mxu0 0
    %595 = vmatprep.subr.bf16.mxu0 0
    %596 = vmatpush2.bf16.msra.mxu0 0
    %597 = vmatprep.subr.bf16.mxu0 0
    %598 = vmatpush2.bf16.msra.mxu0 0
    %599 = vmatprep.mubr.bf16.mxu0 0
    %600 = vmatmul.mubr.bf16.gmra.mxu0 %v565
    %v601 = vpop.f32.mrf.mxu0
    %v602 = vadd.f32 0.0, %v601
    %v603 = vpop.f32.mrf.mxu0
    %v604 = vadd.f32 0.0, %v603
    %v605 = vpop.f32.mrf.mxu0
    %v606 = vpop.f32.mrf.mxu0
    %607 = vdwg.mxu0
    %v608 = vlaneseq
    %v609 = vshrl.u32 %v608, 7
    %v610 = vsub.s32 0, %v609
    %v611 = vrot.slane %v602, %v610
    %v612 = vlaneseq
    %v613 = vshrl.u32 %v612, 7
    %v614 = vsub.s32 0, %v613
    %v615 = vrot.slane %v604, %v614
    %v616 = vsel %vm241, %v611, 0.0
    %v617 = vsel %vm242, %v615, 0.0
    %v618 = vpack.c.bf16 %v616, %v616
    %v619 = vpack.c.bf16 %v617, %v617
    %620 = vrot.lane.b32.xlu0 %v382, 96
    %v621 = vpop.permute.xlu0 %620
    %622 = vrot.lane.b32.xlu0 %v383, 96
    %v623 = vpop.permute.xlu0 %622
    %624 = vrot.lane.b32.xlu0 %v384, 96
    %v625 = vpop.permute.xlu0 %624
    %626 = vrot.lane.b32.xlu0 %v385, 96
    %v627 = vpop.permute.xlu0 %626
    %628 = vrot.lane.b32.xlu0 %v386, 96
    %v629 = vpop.permute.xlu0 %628
    %630 = vrot.lane.b32.xlu0 %v387, 96
    %v631 = vpop.permute.xlu0 %630
    %632 = vrot.lane.b32.xlu0 %v388, 96
    %v633 = vpop.permute.xlu0 %632
    %634 = vrot.lane.b32.xlu0 %v389, 96
    %v635 = vpop.permute.xlu0 %634
    %636 = vrot.lane.b32.xlu0 %v390, 96
    %v637 = vpop.permute.xlu0 %636
    %638 = vrot.lane.b32.xlu0 %v391, 96
    %v639 = vpop.permute.xlu0 %638
    %640 = vrot.lane.b32.xlu0 %v392, 96
    %v641 = vpop.permute.xlu0 %640
    %642 = vrot.lane.b32.xlu0 %v393, 96
    %v643 = vpop.permute.xlu0 %642
    %644 = vrot.lane.b32.xlu0 %v394, 96
    %v645 = vpop.permute.xlu0 %644
    %646 = vrot.lane.b32.xlu0 %v395, 96
    %v647 = vpop.permute.xlu0 %646
    %648 = vrot.lane.b32.xlu0 %v396, 96
    %v649 = vpop.permute.xlu0 %648
    %650 = vrot.lane.b32.xlu0 %v397, 96
    %v651 = vpop.permute.xlu0 %650
    %668 = vmatprep.subr.bf16.mxu0 0
    %669 = vmatpush1.bf16.msra.mxu0 %v635
    %670 = vmatprep.subr.bf16.mxu0 0
    %671 = vmatpush1.bf16.msra.mxu0 %v633
    %672 = vmatprep.subr.bf16.mxu0 0
    %673 = vmatpush1.bf16.msra.mxu0 %v631
    %674 = vmatprep.subr.bf16.mxu0 0
    %675 = vmatpush1.bf16.msra.mxu0 %v629
    %676 = vmatprep.subr.bf16.mxu0 0
    %677 = vmatpush1.bf16.msra.mxu0 %v627
    %678 = vmatprep.subr.bf16.mxu0 0
    %679 = vmatpush1.bf16.msra.mxu0 %v625
    %680 = vmatprep.subr.bf16.mxu0 0
    %681 = vmatpush1.bf16.msra.mxu0 %v623
    %682 = vmatprep.subr.bf16.mxu0 0
    %683 = vmatpush1.bf16.msra.mxu0 %v621
    %684 = vmatprep.subr.bf16.mxu0 0
    %685 = vmatpush2.bf16.msra.mxu0 %v651
    %686 = vmatprep.subr.bf16.mxu0 0
    %687 = vmatpush2.bf16.msra.mxu0 %v649
    %688 = vmatprep.subr.bf16.mxu0 0
    %689 = vmatpush2.bf16.msra.mxu0 %v647
    %690 = vmatprep.subr.bf16.mxu0 0
    %691 = vmatpush2.bf16.msra.mxu0 %v645
    %692 = vmatprep.subr.bf16.mxu0 0
    %693 = vmatpush2.bf16.msra.mxu0 %v643
    %694 = vmatprep.subr.bf16.mxu0 0
    %695 = vmatpush2.bf16.msra.mxu0 %v641
    %696 = vmatprep.subr.bf16.mxu0 0
    %697 = vmatpush2.bf16.msra.mxu0 %v639
    %698 = vmatprep.subr.bf16.mxu0 0
    %699 = vmatpush2.bf16.msra.mxu0 %v637
    %700 = vmatprep.mubr.bf16.mxu0 %v619
    %701 = vmatmul.mubr.bf16.gmra.mxu0 %v618
    %v702 = vpop.f32.mrf.mxu0
    %v703 = vadd.f32 %v224, %v702
    %v704 = vpop.f32.mrf.mxu0
    %v705 = vpop.f32.mrf.mxu0
    %v706 = vpop.f32.mrf.mxu0
    %707 = vdwg.mxu0
    %v708 = vsel %vm269, %v703, 0.0
    %709 = vadd.xlane.f32.xlu0 %v708
    %v710 = vpop.xlane.xlu0 %709
    %v711 = vrot.slane %v710, 4
    %v712 = vadd.f32 %v710, %v711
    %v713 = vrot.slane %v712, 2
    %v714 = vadd.f32 %v712, %v713
    %v715 = vrot.slane %v714, 1
    %v716 = vadd.f32 %v714, %v715
    %v717 = vmul.f32 %v703, %v703
    %v718 = vsel %vm269, %v717, 0.0
    %719 = vadd.xlane.f32.xlu0 %v718
    %v720 = vpop.xlane.xlu0 %719
    %v721 = vrot.slane %v720, 4
    %v722 = vadd.f32 %v720, %v721
    %v723 = vrot.slane %v722, 2
    %v724 = vadd.f32 %v722, %v723
    %v725 = vrot.slane %v724, 1
    %v726 = vadd.f32 %v724, %v725
    %v727 = vrcp.pop 256.0
    %v728 = vmul.f32 %v716, %v727
    %v729 = vmul.f32 %v726, %v727
    %v730 = vmul.f32 %v728, %v728
    %v731 = vsub.f32 %v729, %v730
    %v732 = vsub.f32 %v703, %v728
    %v733 = vadd.f32 %v731, 1e-06
    %v734 = vrsqrt.pop %v733
    %v735 = vmul.f32 %v732, %v734
    %v736 = vmul.f32 %v735, %v87
    %v737 = vadd.f32 %v736, %v88
    %v738 = vpack.c.bf16 %v737, %v737
    %v743 = vunpack.c.l.b16 %v42
    %v744 = vunpack.c.l.b16 %v43
    %v745 = vunpack.c.l.b16 %v44
    %v746 = vunpack.c.l.b16 %v45
    %v747 = vpack.c.b16 %v744, %v743
    %v748 = vpack.c.b16 %v746, %v745
    %v752 = vsel %vm269, %v738, 0
    %754 = vmatprep.subr.bf16.mxu0 0
    %755 = vmatpush1.bf16.msra.mxu0 0
    %756 = vmatprep.subr.bf16.mxu0 0
    %757 = vmatpush1.bf16.msra.mxu0 0
    %758 = vmatprep.subr.bf16.mxu0 0
    %759 = vmatpush1.bf16.msra.mxu0 0
    %760 = vmatprep.subr.bf16.mxu0 0
    %761 = vmatpush1.bf16.msra.mxu0 0
    %762 = vmatprep.subr.bf16.mxu0 0
    %763 = vmatpush1.bf16.msra.mxu0 0
    %764 = vmatprep.subr.bf16.mxu0 0
    %765 = vmatpush1.bf16.msra.mxu0 0
    %766 = vmatprep.subr.bf16.mxu0 0
    %767 = vmatpush1.bf16.msra.mxu0 %v748
    %768 = vmatprep.subr.bf16.mxu0 0
    %769 = vmatpush1.bf16.msra.mxu0 %v747
    %770 = vmatprep.subr.bf16.mxu0 0
    %771 = vmatpush2.bf16.msra.mxu0 0
    %772 = vmatprep.subr.bf16.mxu0 0
    %773 = vmatpush2.bf16.msra.mxu0 0
    %774 = vmatprep.subr.bf16.mxu0 0
    %775 = vmatpush2.bf16.msra.mxu0 0
    %776 = vmatprep.subr.bf16.mxu0 0
    %777 = vmatpush2.bf16.msra.mxu0 0
    %778 = vmatprep.subr.bf16.mxu0 0
    %779 = vmatpush2.bf16.msra.mxu0 0
    %780 = vmatprep.subr.bf16.mxu0 0
    %781 = vmatpush2.bf16.msra.mxu0 0
    %782 = vmatprep.subr.bf16.mxu0 0
    %783 = vmatpush2.bf16.msra.mxu0 0
    %784 = vmatprep.subr.bf16.mxu0 0
    %785 = vmatpush2.bf16.msra.mxu0 0
    %786 = vmatprep.mubr.bf16.mxu0 0
    %787 = vmatmul.mubr.bf16.gmra.mxu0 %v752
    %v788 = vpop.f32.mrf.mxu0
    %v789 = vadd.f32 0.0, %v788
    %v790 = vpop.f32.mrf.mxu0
    %v791 = vpop.f32.mrf.mxu0
    %v792 = vpop.f32.mrf.mxu0
    %793 = vdwg.mxu0
    %v794 = vpack.c.bf16 %v789, %v789
    %v795 = vlaneseq
    %v796 = vshrl.u32 %v795, 7
    %v797 = vsub.s32 0, %v796
    %v798 = vrot.slane %v85, %v797
    %v800 = vsel %vm97, %v91, 0
    %v803 = vsel %vm101, %v794, 0
    %805 = vmatprep.subr.bf16.mxu0 0
    %806 = vmatpush1.bf16.msra.mxu0 0
    %807 = vmatprep.subr.bf16.mxu0 0
    %808 = vmatpush1.bf16.msra.mxu0 0
    %809 = vmatprep.subr.bf16.mxu0 0
    %810 = vmatpush1.bf16.msra.mxu0 0
    %811 = vmatprep.subr.bf16.mxu0 0
    %812 = vmatpush1.bf16.msra.mxu0 0
    %813 = vmatprep.subr.bf16.mxu0 0
    %814 = vmatpush1.bf16.msra.mxu0 0
    %815 = vmatprep.subr.bf16.mxu0 0
    %816 = vmatpush1.bf16.msra.mxu0 0
    %817 = vmatprep.subr.bf16.mxu0 0
    %818 = vmatpush1.bf16.msra.mxu0 0
    %819 = vmatprep.subr.bf16.mxu0 0
    %820 = vmatpush1.bf16.msra.mxu0 %v803
    %821 = vmatprep.subr.bf16.mxu0 0
    %822 = vmatpush2.bf16.msra.mxu0 0
    %823 = vmatprep.subr.bf16.mxu0 0
    %824 = vmatpush2.bf16.msra.mxu0 0
    %825 = vmatprep.subr.bf16.mxu0 0
    %826 = vmatpush2.bf16.msra.mxu0 0
    %827 = vmatprep.subr.bf16.mxu0 0
    %828 = vmatpush2.bf16.msra.mxu0 0
    %829 = vmatprep.subr.bf16.mxu0 0
    %830 = vmatpush2.bf16.msra.mxu0 0
    %831 = vmatprep.subr.bf16.mxu0 0
    %832 = vmatpush2.bf16.msra.mxu0 0
    %833 = vmatprep.subr.bf16.mxu0 0
    %834 = vmatpush2.bf16.msra.mxu0 0
    %835 = vmatprep.subr.bf16.mxu0 0
    %836 = vmatpush2.bf16.msra.mxu0 0
    %837 = vmatprep.mubr.bf16.mxu0 0
    %838 = vmatmul.mubr.bf16.gmra.mxu0 %v800
    %v839 = vpop.f32.mrf.mxu0
    %v840 = vadd.f32 %v798, %v839
    %v841 = vpop.f32.mrf.mxu0
    %v842 = vpop.f32.mrf.mxu0
    %v843 = vpop.f32.mrf.mxu0
    %844 = vdwg.mxu0
    %vm845 = vcmp.gt.f32.partialorder %v840, 0.0
    %847 = vrot.lane.b32.xlu0 %v840, 32
    %v848 = vpop.permute.xlu0 %847
    %v850 = vmul.f32 %v798, %v848
    %852 = vrot.lane.b32.xlu0 %v850, 96
    %v853 = vpop.permute.xlu0 %852
    %v855 = vsel %vm845, %v840, %v853
    %v856 = vpack.c.bf16 %v855, %v855
    %v857 = vlaneseq
    %v858 = vshrl.u32 %v857, 7
    %v859 = vsub.s32 0, %v858
    %v860 = vrot.slane %v86, %v859
    %v865 = vunpack.c.l.b16 %v46
    %v866 = vunpack.c.l.b16 %v47
    %v867 = vunpack.c.l.b16 %v48
    %v868 = vunpack.c.l.b16 %v49
    %v869 = vpack.c.b16 %v866, %v865
    %v870 = vpack.c.b16 %v868, %v867
    %v874 = vsel %vm269, %v856, 0
    %876 = vmatprep.subr.bf16.mxu0 0
    %877 = vmatpush1.bf16.msra.mxu0 0
    %878 = vmatprep.subr.bf16.mxu0 0
    %879 = vmatpush1.bf16.msra.mxu0 0
    %880 = vmatprep.subr.bf16.mxu0 0
    %881 = vmatpush1.bf16.msra.mxu0 0
    %882 = vmatprep.subr.bf16.mxu0 0
    %883 = vmatpush1.bf16.msra.mxu0 0
    %884 = vmatprep.subr.bf16.mxu0 0
    %885 = vmatpush1.bf16.msra.mxu0 0
    %886 = vmatprep.subr.bf16.mxu0 0
    %887 = vmatpush1.bf16.msra.mxu0 0
    %888 = vmatprep.subr.bf16.mxu0 0
    %889 = vmatpush1.bf16.msra.mxu0 %v870
    %890 = vmatprep.subr.bf16.mxu0 0
    %891 = vmatpush1.bf16.msra.mxu0 %v869
    %892 = vmatprep.subr.bf16.mxu0 0
    %893 = vmatpush2.bf16.msra.mxu0 0
    %894 = vmatprep.subr.bf16.mxu0 0
    %895 = vmatpush2.bf16.msra.mxu0 0
    %896 = vmatprep.subr.bf16.mxu0 0
    %897 = vmatpush2.bf16.msra.mxu0 0
    %898 = vmatprep.subr.bf16.mxu0 0
    %899 = vmatpush2.bf16.msra.mxu0 0
    %900 = vmatprep.subr.bf16.mxu0 0
    %901 = vmatpush2.bf16.msra.mxu0 0
    %902 = vmatprep.subr.bf16.mxu0 0
    %903 = vmatpush2.bf16.msra.mxu0 0
    %904 = vmatprep.subr.bf16.mxu0 0
    %905 = vmatpush2.bf16.msra.mxu0 0
    %906 = vmatprep.subr.bf16.mxu0 0
    %907 = vmatpush2.bf16.msra.mxu0 0
    %908 = vmatprep.mubr.bf16.mxu0 0
    %909 = vmatmul.mubr.bf16.gmra.mxu0 %v874
    %v910 = vpop.f32.mrf.mxu0
    %v911 = vadd.f32 %v860, %v910
    %v912 = vpop.f32.mrf.mxu0
    %v913 = vpop.f32.mrf.mxu0
    %v914 = vpop.f32.mrf.mxu0
    %915 = vdwg.mxu0
    %916 = vst [vmem:[#allocation5] sm:$0xff] %v911
    // Predicated region
    $region22: #{motion_generator_forward.1} parent=1 // pred_check
      _
    $region23: #{motion_generator_forward.1} parent=1 // pred_check_branch
      %918 = sbr.rel (0) target = $region25
    $region24: #{motion_generator_forward.1} parent=1 // pred_region
      %s920 = ssub.s32 128, 128
      %921 = vsyncadd [#allocation4], %s920
      %s923 = sshll.u32 [#allocation5], 4
      %s924 = int_to_ptr.vmem [resolvable:$true] %s923
      %926 = dma.vmem_to_hbm [thread:$0]  %s924, 128, %s4, [#allocation4]
    $region25: #{motion_generator_forward.1} parent=1 // pred_fallthru
      _
    // Predicated region
    $region26: #{motion_generator_forward.1} parent=1 // pred_check
      _
    $region27: #{motion_generator_forward.1} parent=1 // pred_check_branch
      %928 = sbr.rel (0) target = $region29
    $region28: #{motion_generator_forward.1} parent=1 // pred_region
      %929 = dma.done [#allocation4], 128
    $region29: #{motion_generator_forward.1} parent=1 // pred_fallthru
      _
    %930 = vsyncpa [#allocation3], 1
    %931 = vsyncpa [#allocation4], 1

</llo_original>
